<compile_context>
chip_gen: v5e
topology: v5e:2x2
jax: 0.10.0
libtpu: 0.0.40
codegen_flags: <defaults>
</compile_context>

<pallas_src>
import functools
import math

import jax
import jax.numpy as jnp
from jax.experimental import pallas as pl
from jax.experimental.pallas import tpu as pltpu


# ---------------------------------------------------------------------------
# Kernel bodies
# ---------------------------------------------------------------------------
def _softmax_rows(energy, approx):
    """Numerically-stable row softmax; divide routed to the EUP via approx reciprocal."""
    m = jnp.max(energy, axis=-1, keepdims=True)
    e = jnp.exp(energy - m)
    denom = jnp.sum(e, axis=-1, keepdims=True)
    if approx:
        return e * pl.reciprocal(denom, approx=True)
    return e / denom


def _attention_tail(inp, ctx, pre, wq, wv, mask, mxu_dtype, approx):
    """Post-precompute attention math on VMEM-resident tiles.

    inp  : [Bt, Dq]       query tile (native dtype)
    ctx  : [Bt, S, Da]    context tile (native dtype)
    pre  : [Bt, S, Datt]  linear_pre(context) tile (f32 from the MXU, or caller dtype)
    wq   : [Dq, Datt]     linear_q weight (transposed)
    wv   : [1, Datt]      linear_v weight (kept f32 for the elementwise path)
    mask : [Bt, S]        1.0 = masked, 0.0 = keep (binary, f32)
    """
    # Query projection on the MXU, f32 accumulate.
    target = jnp.dot(inp.astype(mxu_dtype), wq.astype(mxu_dtype),
                     preferred_element_type=jnp.float32)                 # [Bt, Datt] f32
    tmp = jnp.tanh(pre + target[:, None, :])                             # f32 (EUP tanh)
    # energy: VPU broadcast-mul + XLU lane reduce.  Routing it through the MXU is only
    # worth it if profiling shows VPU/XLU (not EUP/HBM) as the binding slot.
    energy = jnp.sum(tmp * wv.astype(jnp.float32)[None, :, :], axis=-1)  # [Bt, S] f32
    # Binary mask -> single select (identical to energy*(1-mask) + mask*(-1e6)).
    energy = jnp.where(mask != 0.0, jnp.float32(-1e6), energy)
    score = _softmax_rows(energy, approx)                                # [Bt, S] f32
    # Weighted context, f32 accumulate (small sublane reduce over S).
    wctx = jnp.sum(score[:, :, None] * ctx, axis=1)                      # [Bt, Da] f32
    return wctx, score


@functools.lru_cache(maxsize=None)
def _fused_kernel(mxu_dtype, approx, write_pre):
    """Fused forward: precompute (linear_pre) + attention, one batch tile per grid step."""

    def kernel(inp_ref, ctx_ref, wpre_ref, bpre_ref, wq_ref, wv_ref, mask_ref, *outs):
        bt, s, da = ctx_ref.shape
        datt = wpre_ref.shape[-1]
        ctx = ctx_ref[...]
        # linear_pre(context): [Bt*S, Da] @ [Da, Datt] + b on the MXU, f32 accumulate.
        pre = jnp.dot(ctx.reshape(bt * s, da).astype(mxu_dtype),
                      wpre_ref[...].astype(mxu_dtype),
                      preferred_element_type=jnp.float32)
        pre = (pre + bpre_ref[...].astype(jnp.float32)).reshape(bt, s, datt)
        wctx, score = _attention_tail(inp_ref[...], ctx, pre, wq_ref[...], wv_ref[...],
                                      mask_ref[...], mxu_dtype, approx)
        if write_pre:
            wctx_ref, score_ref, pre_ref = outs
            pre_ref[...] = pre.astype(pre_ref.dtype)
        else:
            wctx_ref, score_ref = outs        # skip the [Bt,S,Datt] HBM writeback
        wctx_ref[...] = wctx.astype(wctx_ref.dtype)
        score_ref[...] = score.astype(score_ref.dtype)

    return kernel


@functools.lru_cache(maxsize=None)
def _precomputed_kernel(mxu_dtype, approx):
    """Fused forward when `precompute` is supplied by the caller (decoder-step reuse)."""

    def kernel(inp_ref, ctx_ref, pre_ref, wq_ref, wv_ref, mask_ref, wctx_ref, score_ref):
        wctx, score = _attention_tail(inp_ref[...], ctx_ref[...], pre_ref[...],
                                      wq_ref[...], wv_ref[...], mask_ref[...],
                                      mxu_dtype, approx)
        wctx_ref[...] = wctx.astype(wctx_ref.dtype)
        score_ref[...] = score.astype(score_ref.dtype)

    return kernel


# ---------------------------------------------------------------------------
# Tiling helpers
# ---------------------------------------------------------------------------
def _block_vmem_bytes(bt, s, da, datt, dq, in_dtype, write_pre):
    """Rough per-grid-step VMEM footprint: double-buffered I/O + f32 temporaries."""
    isz = jnp.dtype(in_dtype).itemsize
    ctx_b = bt * s * da * isz
    pre_b = bt * s * datt * 4
    io = (ctx_b + bt * dq * isz + bt * s * 4                      # ctx, input, mask
          + (da * datt + datt + dq * datt + datt) * 4             # weights + bias
          + bt * da * 4 + bt * s * 4 + (pre_b if write_pre else 0))
    return 2 * io + 3 * pre_b                                     # 2x dbl-buffer, ~3x temps


def _choose_batch_tile(b, s, da, datt, dq, in_dtype, write_pre,
                       budget_bytes=20 * 2 ** 20):
    """Largest batch tile that divides B, keeps legal (8,.) sublane blocks, fits VMEM."""
    cands = sorted({d for d in range(1, b + 1)
                    if b % d == 0 and (d % 8 == 0 or d == b)}, reverse=True)
    for bt in cands:
        if _block_vmem_bytes(bt, s, da, datt, dq, in_dtype, write_pre) <= budget_bytes:
            return bt
    return cands[-1]


# ---------------------------------------------------------------------------
# Wrapper
# ---------------------------------------------------------------------------
class ConcatAttention:
    """JAX/Pallas port of the PyTorch ConcatAttention module (inference forward)."""

    def __init__(self, attend_dim, query_dim, att_dim, key, *,
                 mxu_dtype=jnp.bfloat16, approx_softmax=True,
                 batch_tile=None, return_precompute=True):
        self.attend_dim = attend_dim
        self.query_dim = query_dim
        self.att_dim = att_dim
        self.mxu_dtype = mxu_dtype
        self.approx_softmax = approx_softmax
        self.batch_tile = batch_tile
        self.return_precompute = return_precompute
        kp, kb, kq, kv = jax.random.split(key, 4)
        b_pre = 1.0 / math.sqrt(attend_dim)
        b_q = 1.0 / math.sqrt(query_dim)
        b_v = 1.0 / math.sqrt(att_dim)
        # nn.Linear stores weight as [out, in]; keep transposed [in, out] for the kernel.
        # Matmul weights are shipped in mxu_dtype (halves weight DMA when bf16);
        # bias and the elementwise-path w_v stay f32.
        self.w_pre_t = jax.random.uniform(kp, (attend_dim, att_dim), jnp.float32,
                                          -b_pre, b_pre).astype(mxu_dtype)
        self.b_pre = jax.random.uniform(kb, (1, att_dim), jnp.float32, -b_pre, b_pre)
        self.w_q_t = jax.random.uniform(kq, (query_dim, att_dim), jnp.float32,
                                        -b_q, b_q).astype(mxu_dtype)
        self.w_v = jax.random.uniform(kv, (1, att_dim), jnp.float32, -b_v, b_v)
        self.mask = None

    def applyMask(self, mask):
        self.mask = mask

    def __call__(self, input, context, precompute=None):
        # input: [B, query_dim], context: [B, S, attend_dim]
        b, s, da = context.shape
        dq = input.shape[-1]
        datt = self.att_dim
        mask = self.mask if self.mask is not None else jnp.zeros((b, s), jnp.float32)
        mask = mask.astype(jnp.float32)

        write_pre = precompute is None and self.return_precompute
        bt = self.batch_tile or _choose_batch_tile(b, s, da, datt, dq,
                                                   context.dtype, write_pre)
        assert b % bt == 0 and (bt % 8 == 0 or bt == b), (b, bt)
        grid = (b // bt,)
        est = _block_vmem_bytes(bt, s, da, datt, dq, context.dtype, write_pre)
        compiler_params = pltpu.CompilerParams(
            dimension_semantics=("parallel",),       # batch tiles -> both TCs on v7x
            vmem_limit_bytes=int(min(max(2 * est, 32 * 2 ** 20), 48 * 2 ** 20)))

        inp_spec = pl.BlockSpec((bt, dq), lambda i: (i, 0))
        ctx_spec = pl.BlockSpec((bt, s, da), lambda i: (i, 0, 0))
        mask_spec = pl.BlockSpec((bt, s), lambda i: (i, 0))
        wq_spec = pl.BlockSpec((dq, datt), lambda i: (0, 0))
        wv_spec = pl.BlockSpec((1, datt), lambda i: (0, 0))
        wctx_spec = pl.BlockSpec((bt, da), lambda i: (i, 0))
        score_spec = pl.BlockSpec((bt, s), lambda i: (i, 0))

        if precompute is None:
            out_shape = [jax.ShapeDtypeStruct((b, da), context.dtype),
                         jax.ShapeDtypeStruct((b, s), context.dtype)]
            out_specs = [wctx_spec, score_spec]
            if write_pre:
                # precompute returned in f32: reuse path sees exactly the in-kernel values.
                out_shape.append(jax.ShapeDtypeStruct((b, s, datt), jnp.float32))
                out_specs.append(pl.BlockSpec((bt, s, datt), lambda i: (i, 0, 0)))
            outs = pl.pallas_call(
                _fused_kernel(self.mxu_dtype, self.approx_softmax, write_pre),
                out_shape=tuple(out_shape),
                grid=grid,
                in_specs=[inp_spec, ctx_spec,
                          pl.BlockSpec((da, datt), lambda i: (0, 0)),
                          pl.BlockSpec((1, datt), lambda i: (0, 0)),
                          wq_spec, wv_spec, mask_spec],
                out_specs=tuple(out_specs),
                compiler_params=compiler_params,
            )(input, context, self.w_pre_t, self.b_pre, self.w_q_t, self.w_v, mask)
            if write_pre:
                wctx, score, precompute = outs
            else:
                (wctx, score), precompute = outs, None
        else:
            pre_spec = pl.BlockSpec((bt, s, datt), lambda i: (i, 0, 0))
            wctx, score = pl.pallas_call(
                _precomputed_kernel(self.mxu_dtype, self.approx_softmax),
                out_shape=(jax.ShapeDtypeStruct((b, da), context.dtype),
                           jax.ShapeDtypeStruct((b, s), context.dtype)),
                grid=grid,
                in_specs=[inp_spec, ctx_spec, pre_spec, wq_spec, wv_spec, mask_spec],
                out_specs=(wctx_spec, score_spec),
                compiler_params=compiler_params,
            )(input, context, precompute, self.w_q_t, self.w_v, mask)

        return wctx, score, precompute


# ---------------------------------------------------------------------------
# Pure-JAX f32 reference (mirrors the PyTorch forward)
# ---------------------------------------------------------------------------
def _reference_forward(model, input, context, precompute=None, mask=None):
    w_pre = model.w_pre_t.astype(jnp.float32)
    w_q = model.w_q_t.astype(jnp.float32)
    if precompute is None:
        precompute = context.astype(jnp.float32) @ w_pre + model.b_pre   # [B, S, att]
    target = input.astype(jnp.float32) @ w_q                             # [B, att]
    tmp = jnp.tanh(precompute.astype(jnp.float32) + target[:, None, :])
    energy = jnp.einsum('bsd,d->bs', tmp, model.w_v[0])
    if mask is not None:
        energy = energy * (1.0 - mask) + mask * (-1e6)
    score = jax.nn.softmax(energy, axis=-1)
    wctx = jnp.einsum('bs,bsd->bd', score, context.astype(jnp.float32))
    return wctx, score, precompute


if __name__ == "__main__":
    key = jax.random.PRNGKey(0)
    batch, sourceL = 16, 16
    attend_dim, query_dim, att_dim = 128, 64, 128

    k_model, k_x, k_ctx, k_mask = jax.random.split(key, 4)
    x = jax.random.normal(k_x, (batch, query_dim), jnp.float32)
    ctx = jax.random.normal(k_ctx, (batch, sourceL, attend_dim), jnp.float32)
    mask = (jax.random.uniform(k_mask, (batch, sourceL)) < 0.3).astype(jnp.float32)

    # ---- Exact-precision instance (f32 MXU operands, exact reciprocal) -----------
    # batch_tile=8 -> grid=(2,), exercising the pipelined / "parallel" batch grid.
    attn = ConcatAttention(attend_dim, query_dim, att_dim, key=k_model,
                           mxu_dtype=jnp.float32, approx_softmax=False, batch_tile=8)

    # Path 1: no mask, precompute computed inside the fused kernel.
    wctx, score, pre = jax.block_until_ready(attn(x, ctx))
    ref_wctx, ref_score, ref_pre = _reference_forward(attn, x, ctx)
    assert wctx.shape == (batch, attend_dim)
    assert score.shape == (batch, sourceL)
    assert pre.shape == (batch, sourceL, att_dim)
    assert jnp.allclose(pre, ref_pre, atol=1e-4, rtol=1e-4)
    assert jnp.allclose(score, ref_score, atol=1e-4, rtol=1e-4)
    assert jnp.allclose(wctx, ref_wctx, atol=1e-4, rtol=1e-4)
    assert jnp.allclose(jnp.sum(score, axis=-1), 1.0, atol=1e-4)

    # Path 2: mask applied, precompute reused (decoder-step pattern).
    attn.applyMask(mask)
    wctx2, score2, _ = jax.block_until_ready(attn(x, ctx, precompute=pre))
    ref_wctx2, ref_score2, _ = _reference_forward(attn, x, ctx, precompute=pre, mask=mask)
    assert jnp.allclose(score2, ref_score2, atol=1e-4, rtol=1e-4)
    assert jnp.allclose(wctx2, ref_wctx2, atol=1e-4, rtol=1e-4)
    assert float(jnp.max(score2 * mask)) < 1e-6       # masked slots get ~zero weight

    # ---- Fast instance (bf16 MXU operands, approx reciprocal, no pre writeback) --
    fast = ConcatAttention(attend_dim, query_dim, att_dim, key=k_model,
                           mxu_dtype=jnp.bfloat16, approx_softmax=True,
                           return_precompute=False)
    wctx_f, score_f, pre_f = jax.block_until_ready(fast(x, ctx))
    assert pre_f is None                              # precompute writeback skipped
    ref_wctx_f, ref_score_f, _ = _reference_forward(fast, x, ctx)
    assert jnp.allclose(score_f, ref_score_f, atol=1e-2, rtol=1e-2)
    assert jnp.allclose(wctx_f, ref_wctx_f, atol=5e-2, rtol=5e-2)
    assert jnp.allclose(jnp.sum(score_f, axis=-1), 1.0, atol=1e-2)

    fast.applyMask(mask)
    wctx_f2, score_f2, _ = jax.block_until_ready(fast(x, ctx, precompute=ref_pre))
    ref_wctx_f2, ref_score_f2, _ = _reference_forward(fast, x, ctx,
                                                      precompute=ref_pre, mask=mask)
    assert jnp.allclose(score_f2, ref_score_f2, atol=1e-2, rtol=1e-2)
    assert jnp.allclose(wctx_f2, ref_wctx_f2, atol=5e-2, rtol=5e-2)
    assert float(jnp.max(score_f2 * mask)) < 1e-6

    print("KERNEL_OK")
</pallas_src>

<mosaic_0001>
module attributes {stable_mosaic.version = 11 : i64} {
  func.func @kernel(%arg0: i32, %arg1: memref<8x64xf32, #tpu.memory_space<vmem>>, %arg2: memref<8x16x128xf32, #tpu.memory_space<vmem>>, %arg3: memref<128x128xf32, #tpu.memory_space<vmem>>, %arg4: memref<1x128xf32, #tpu.memory_space<vmem>>, %arg5: memref<64x128xf32, #tpu.memory_space<vmem>>, %arg6: memref<1x128xf32, #tpu.memory_space<vmem>>, %arg7: memref<8x16xf32, #tpu.memory_space<vmem>>, %arg8: memref<8x128xf32, #tpu.memory_space<vmem>>, %arg9: memref<8x16xf32, #tpu.memory_space<vmem>>, %arg10: memref<8x16x128xf32, #tpu.memory_space<vmem>>) attributes {dimension_semantics = [#tpu.dimension_semantics<parallel>], iteration_bounds = array<i64: 2>, scalar_prefetch = 0 : i64, scratch_operands = 0 : i64, tpu.core_type = #tpu.core_type<tc>, window_params = [{transform_indices = @transform_0, window_bounds = array<i64: 8, 64>}, {transform_indices = @transform_1, window_bounds = array<i64: 8, 16, 128>}, {pipeline_mode = #tpu.pipeline_mode<synchronous>, transform_indices = @transform_2, window_bounds = array<i64: 128, 128>}, {pipeline_mode = #tpu.pipeline_mode<synchronous>, transform_indices = @transform_3, window_bounds = array<i64: 1, 128>}, {pipeline_mode = #tpu.pipeline_mode<synchronous>, transform_indices = @transform_4, window_bounds = array<i64: 64, 128>}, {pipeline_mode = #tpu.pipeline_mode<synchronous>, transform_indices = @transform_5, window_bounds = array<i64: 1, 128>}, {transform_indices = @transform_6, window_bounds = array<i64: 8, 16>}, {transform_indices = @transform_7, window_bounds = array<i64: 8, 128>}, {transform_indices = @transform_8, window_bounds = array<i64: 8, 16>}, {transform_indices = @transform_9, window_bounds = array<i64: 8, 16, 128>}]} {
    %c0 = arith.constant 0 : index
    %c0_0 = arith.constant 0 : index
    %c0_1 = arith.constant 0 : index
    %0 = vector.load %arg2[%c0, %c0_0, %c0_1] : memref<8x16x128xf32, #tpu.memory_space<vmem>>, vector<8x16x128xf32>
    %1 = vector.shape_cast %0 : vector<8x16x128xf32> to vector<128x128xf32>
    %c0_2 = arith.constant 0 : index
    %c0_3 = arith.constant 0 : index
    %2 = vector.load %arg3[%c0_2, %c0_3] : memref<128x128xf32, #tpu.memory_space<vmem>>, vector<128x128xf32>
    %cst = arith.constant dense<0.000000e+00> : vector<128x128xf32>
    %3 = tpu.matmul %1, %2, %cst {dimension_numbers = #tpu.dot_dimension_numbers<[1], [0], [0], [1], [0, 0, 1, 1], [], []>} : vector<128x128xf32>, vector<128x128xf32>, vector<128x128xf32> -> vector<128x128xf32>
    %c0_4 = arith.constant 0 : index
    %c0_5 = arith.constant 0 : index
    %4 = vector.load %arg4[%c0_4, %c0_5] : memref<1x128xf32, #tpu.memory_space<vmem>>, vector<1x128xf32>
    %5 = vector.broadcast %4 : vector<1x128xf32> to vector<128x128xf32>
    %6 = arith.addf %3, %5 : vector<128x128xf32>
    %7 = vector.shape_cast %6 : vector<128x128xf32> to vector<8x16x128xf32>
    %c0_6 = arith.constant 0 : index
    %c0_7 = arith.constant 0 : index
    %8 = vector.load %arg1[%c0_6, %c0_7] : memref<8x64xf32, #tpu.memory_space<vmem>>, vector<8x64xf32>
    %c0_8 = arith.constant 0 : index
    %c0_9 = arith.constant 0 : index
    %9 = vector.load %arg5[%c0_8, %c0_9] : memref<64x128xf32, #tpu.memory_space<vmem>>, vector<64x128xf32>
    %c0_10 = arith.constant 0 : index
    %c0_11 = arith.constant 0 : index
    %10 = vector.load %arg6[%c0_10, %c0_11] : memref<1x128xf32, #tpu.memory_space<vmem>>, vector<1x128xf32>
    %c0_12 = arith.constant 0 : index
    %c0_13 = arith.constant 0 : index
    %11 = vector.load %arg7[%c0_12, %c0_13] : memref<8x16xf32, #tpu.memory_space<vmem>>, vector<8x16xf32>
    %cst_14 = arith.constant dense<0.000000e+00> : vector<8x128xf32>
    %12 = tpu.matmul %8, %9, %cst_14 {dimension_numbers = #tpu.dot_dimension_numbers<[1], [0], [0], [1], [0, 0, 1, 1], [], []>} : vector<8x64xf32>, vector<64x128xf32>, vector<8x128xf32> -> vector<8x128xf32>
    %13 = vector.shape_cast %12 : vector<8x128xf32> to vector<8x1x128xf32>
    %14 = vector.broadcast %13 : vector<8x1x128xf32> to vector<8x16x128xf32>
    %15 = arith.addf %7, %14 : vector<8x16x128xf32>
    %16 = math.tanh %15 : vector<8x16x128xf32>
    %17 = vector.shape_cast %10 : vector<1x128xf32> to vector<1x1x128xf32>
    %18 = vector.broadcast %17 : vector<1x1x128xf32> to vector<8x16x128xf32>
    %19 = arith.mulf %16, %18 : vector<8x16x128xf32>
    %cst_15 = arith.constant dense<0.000000e+00> : vector<8x16xf32>
    %20 = vector.multi_reduction <add>, %19, %cst_15 [2] : vector<8x16x128xf32> to vector<8x16xf32>
    %cst_16 = arith.constant 0.000000e+00 : f32
    %21 = vector.broadcast %cst_16 : f32 to vector<8x16xf32>
    %22 = arith.cmpf one, %11, %21 : vector<8x16xf32>
    %cst_17 = arith.constant -1.000000e+06 : f32
    %23 = vector.broadcast %cst_17 : f32 to vector<8x16xf32>
    %24 = arith.select %22, %23, %20 : vector<8x16xi1>, vector<8x16xf32>
    %cst_18 = arith.constant dense<0xFF800000> : vector<8xf32>
    %25 = vector.multi_reduction <maximumf>, %24, %cst_18 [1] : vector<8x16xf32> to vector<8xf32>
    %26 = vector.shape_cast %25 : vector<8xf32> to vector<8x1xf32>
    %27 = vector.broadcast %26 : vector<8x1xf32> to vector<8x16xf32>
    %28 = arith.subf %24, %27 : vector<8x16xf32>
    %29 = math.exp %28 : vector<8x16xf32>
    %cst_19 = arith.constant dense<0.000000e+00> : vector<8xf32>
    %30 = vector.multi_reduction <add>, %29, %cst_19 [1] : vector<8x16xf32> to vector<8xf32>
    %31 = vector.shape_cast %30 : vector<8xf32> to vector<8x1xf32>
    %32 = vector.broadcast %31 : vector<8x1xf32> to vector<8x16xf32>
    %33 = arith.divf %29, %32 : vector<8x16xf32>
    %34 = vector.shape_cast %33 : vector<8x16xf32> to vector<8x16x1xf32>
    %35 = vector.broadcast %34 : vector<8x16x1xf32> to vector<8x16x128xf32>
    %36 = arith.mulf %35, %0 : vector<8x16x128xf32>
    %cst_20 = arith.constant dense<0.000000e+00> : vector<8x128xf32>
    %37 = vector.multi_reduction <add>, %36, %cst_20 [1] : vector<8x16x128xf32> to vector<8x128xf32>
    %c0_21 = arith.constant 0 : index
    %c0_22 = arith.constant 0 : index
    %c0_23 = arith.constant 0 : index
    %38 = vector.load %arg10[%c0_21, %c0_22, %c0_23] : memref<8x16x128xf32, #tpu.memory_space<vmem>>, vector<8x16x128xf32>
    tpu.vector_store %arg10[%c0_21, %c0_22, %c0_23], %7 {strides = array<i32>} : memref<8x16x128xf32, #tpu.memory_space<vmem>>, vector<8x16x128xf32>,
    %c0_24 = arith.constant 0 : index
    %c0_25 = arith.constant 0 : index
    %39 = vector.load %arg8[%c0_24, %c0_25] : memref<8x128xf32, #tpu.memory_space<vmem>>, vector<8x128xf32>
    tpu.vector_store %arg8[%c0_24, %c0_25], %37 {strides = array<i32>} : memref<8x128xf32, #tpu.memory_space<vmem>>, vector<8x128xf32>,
    %c0_26 = arith.constant 0 : index
    %c0_27 = arith.constant 0 : index
    %40 = vector.load %arg9[%c0_26, %c0_27] : memref<8x16xf32, #tpu.memory_space<vmem>>, vector<8x16xf32>
    tpu.vector_store %arg9[%c0_26, %c0_27], %33 {strides = array<i32>} : memref<8x16xf32, #tpu.memory_space<vmem>>, vector<8x16xf32>,
    return
  }
  func.func @transform_0(%arg0: i32) -> (i32, i32) {
    %c0_i32 = arith.constant 0 : i32
    %c0_i32_0 = arith.constant 0 : i32
    return %arg0, %c0_i32 : i32, i32
  }
  func.func @transform_1(%arg0: i32) -> (i32, i32, i32) {
    %c0_i32 = arith.constant 0 : i32
    %c0_i32_0 = arith.constant 0 : i32
    %c0_i32_1 = arith.constant 0 : i32
    return %arg0, %c0_i32, %c0_i32_0 : i32, i32, i32
  }
  func.func @transform_2(%arg0: i32) -> (i32, i32) {
    %c0_i32 = arith.constant 0 : i32
    %c0_i32_0 = arith.constant 0 : i32
    %c0_i32_1 = arith.constant 0 : i32
    return %c0_i32, %c0_i32_0 : i32, i32
  }
  func.func @transform_3(%arg0: i32) -> (i32, i32) {
    %c0_i32 = arith.constant 0 : i32
    %c0_i32_0 = arith.constant 0 : i32
    %c0_i32_1 = arith.constant 0 : i32
    return %c0_i32, %c0_i32_0 : i32, i32
  }
  func.func @transform_4(%arg0: i32) -> (i32, i32) {
    %c0_i32 = arith.constant 0 : i32
    %c0_i32_0 = arith.constant 0 : i32
    %c0_i32_1 = arith.constant 0 : i32
    return %c0_i32, %c0_i32_0 : i32, i32
  }
  func.func @transform_5(%arg0: i32) -> (i32, i32) {
    %c0_i32 = arith.constant 0 : i32
    %c0_i32_0 = arith.constant 0 : i32
    %c0_i32_1 = arith.constant 0 : i32
    return %c0_i32, %c0_i32_0 : i32, i32
  }
  func.func @transform_6(%arg0: i32) -> (i32, i32) {
    %c0_i32 = arith.constant 0 : i32
    %c0_i32_0 = arith.constant 0 : i32
    return %arg0, %c0_i32 : i32, i32
  }
  func.func @transform_7(%arg0: i32) -> (i32, i32) {
    %c0_i32 = arith.constant 0 : i32
    %c0_i32_0 = arith.constant 0 : i32
    return %arg0, %c0_i32 : i32, i32
  }
  func.func @transform_8(%arg0: i32) -> (i32, i32) {
    %c0_i32 = arith.constant 0 : i32
    %c0_i32_0 = arith.constant 0 : i32
    return %arg0, %c0_i32 : i32, i32
  }
  func.func @transform_9(%arg0: i32) -> (i32, i32, i32) {
    %c0_i32 = arith.constant 0 : i32
    %c0_i32_0 = arith.constant 0 : i32
    %c0_i32_1 = arith.constant 0 : i32
    return %arg0, %c0_i32, %c0_i32_0 : i32, i32, i32
  }
}

</mosaic_0001>

<llo_original>
// kernel: tpu_custom_call.1
$region0: #{tpu_custom_call.1}
  #allocation0 [shape = 'u32[]', space=smem, size = 0x4, offset = 0x4, fixed_abs, tag = 'smem constant byte address 0x4 - core index']
  #allocation1 [shape = 'u32[72,128]{1,0:T(1,128)}', space=vmem, size = 0x9000, scoped, tag = 'internal scratch']
  %s0 = inlined_call_operand.hbm [shape: f32[16,64], index: 0, kind: input, shape index: {}]
  %s1 = inlined_call_operand.hbm [shape: f32[16,16,128], index: 1, kind: input, shape index: {}]
  %s2 = inlined_call_operand.hbm [shape: f32[128,128], index: 2, kind: input, shape index: {}]
  %s3 = inlined_call_operand.vmem [shape: f32[1,128], index: 3, kind: input, shape index: {}]
  %s4 = inlined_call_operand.hbm [shape: f32[64,128], index: 4, kind: input, shape index: {}]
  %s5 = inlined_call_operand.vmem [shape: f32[1,128], index: 5, kind: input, shape index: {}]
  %s6 = inlined_call_operand.hbm [shape: f32[16,16], index: 6, kind: input, shape index: {}]
  %s7 = inlined_call_operand.hbm [shape: f32[16,128], index: 7, kind: output, shape index: {0}]
  %s8 = inlined_call_operand.hbm [shape: f32[16,16], index: 8, kind: output, shape index: {1}]
  %s9 = inlined_call_operand.hbm [shape: f32[16,16,128], index: 9, kind: output, shape index: {2}]
  %10 = xla_tuple %s7, %s8, %s9
  %s11 = sld [smem:[#allocation0]]
  $region97: #{tpu_custom_call.1} parent=0
    _
  %s13 = ssub.s32 1, %s11
  %s14 = scalar_select 0, %s13, %s11
  $region1: #{tpu_custom_call.1} parent=0
    #allocation2 [shape = 'u8[8192]{0}', space=vmem, size = 0x2000, scoped, tag = 'input window, operand 0']
    #allocation3 [shape = 's32[2]{0}', space=sflag, size = 0x8, scoped, tag = 'scoped memory for tpu_custom_call.1']
    #allocation4 [shape = 's32[2]{0}', space=sflag, size = 0x8, scoped, tag = 'scoped memory for tpu_custom_call.1']
    #allocation5 [shape = 'u8[131072]{0}', space=vmem, size = 0x20000, scoped, tag = 'input window, operand 1']
    #allocation6 [shape = 's32[2]{0}', space=sflag, size = 0x8, scoped, tag = 'scoped memory for tpu_custom_call.1']
    #allocation7 [shape = 'u8[65536]{0}', space=vmem, size = 0x10000, scoped, tag = 'input window, operand 2, single buffered']
    #allocation8 [shape = 'u8[32768]{0}', space=vmem, size = 0x8000, scoped, tag = 'input window, operand 4, single buffered']
    #allocation9 [shape = 's32[1]{0}', space=sflag, size = 0x4, scoped, tag = 'scoped memory for tpu_custom_call.1']
    #allocation10 [shape = 'u8[8192]{0}', space=vmem, size = 0x2000, scoped, tag = 'input window, operand 6']
    #allocation11 [shape = 'u8[8192]{0}', space=vmem, size = 0x2000, scoped, tag = 'output window, operand 0']
    #allocation12 [shape = 'u8[8192]{0}', space=vmem, size = 0x2000, scoped, tag = 'output window, operand 1']
    #allocation13 [shape = 's32[2]{0}', space=sflag, size = 0x8, scoped, tag = 'scoped memory for tpu_custom_call.1']
    #allocation14 [shape = 'u8[131072]{0}', space=vmem, size = 0x20000, scoped, tag = 'output window, operand 2']
    %15 = vsyncpa [#allocation3], 0
    %s16 = scalar_lea.sflag [#allocation3], 1
    %17 = vsyncpa %s16, 0
    %18 = vsyncpa [#allocation6], 0
    %s19 = scalar_lea.sflag [#allocation6], 1
    %20 = vsyncpa %s19, 0
    %21 = vsyncpa [#allocation9], 0
    %22 = vsyncpa [#allocation4], 0
    %s23 = scalar_lea.sflag [#allocation4], 1
    %24 = vsyncpa %s23, 0
    %25 = vsyncpa [#allocation13], 0
    %s26 = scalar_lea.sflag [#allocation13], 1
    %27 = vsyncpa %s26, 0
    loop: start=0, step=1, limit=4
    $region2: #{tpu_custom_call.1} parent=1 // loop_pre_header
      _
    $region3: #{tpu_custom_call.1} parent=1 // loop_header
      %s29 = sphi 0, %s33
      %p30 = scmp.ge.s32.totalorder %s29, 4
      %s39 = sphi 0, %s41
      %s42 = sphi 0, %s39
      %s43 = sphi 0, %s42
      %s59 = sphi 0, %s43
      %s65 = sphi 0, %s67
      %s68 = sphi 0, %s65
      %s69 = sphi 0, %s68
      %s85 = sphi 0, %s69
      %s89 = sphi 0, %s89
      %s91 = sphi 0, %s89
      %s92 = sphi 0, %s91
      %s106 = sphi 0, %s92
      %s110 = sphi 0, %s110
      %s112 = sphi 0, %s110
      %s113 = sphi 0, %s112
      %s127 = sphi 0, %s113
      %s131 = sphi 0, %s131
      %s133 = sphi 0, %s131
      %s134 = sphi 0, %s133
      %s148 = sphi 0, %s134
      %s152 = sphi 0, %s152
      %s154 = sphi 0, %s152
      %s155 = sphi 0, %s154
      %s169 = sphi 0, %s155
      %s175 = sphi 0, %s177
      %s178 = sphi 0, %s175
      %s179 = sphi 0, %s178
      %s195 = sphi 0, %s179
      %s201 = sphi 0, %s203
      %s204 = sphi 0, %s201
      %s205 = sphi 0, %s204
      %s221 = sphi 0, %s205
      %s227 = sphi 0, %s229
      %s230 = sphi 0, %s227
      %s231 = sphi 0, %s230
      %s247 = sphi 0, %s231
      %s253 = sphi 0, %s255
      %s256 = sphi 0, %s253
      %s257 = sphi 0, %s256
      %s273 = sphi 0, %s257
    $region4: #{tpu_custom_call.1} parent=1 // loop_header_branch
      %32 = sbr.rel (%p30) target = $region8
    $region5: #{tpu_custom_call.1} parent=1 // loop_body
      %s34 = ssub.s32 %s29, 1
      %s35 = ssub.s32 %s29, 2
      %s36 = sadd.s32 %s29, 1
      %s37 = ssub.s32 %s29, %s36
      %p38 = scmp.eq.s32.totalorder %s37, 0
      %s40 = sadd.s32 %s39, 1
      %s41 = scalar_select %p38, %s39, %s40
      %p44 = pneg %p38
      %p45 = scmp.eq.s32.totalorder %s29, 1
      %p46 = por %p44, %p45
      %p47 = scmp.ne.s32.totalorder %s39, %s42
      %p48 = scmp.eq.s32.totalorder %s29, 0
      %p49 = por %p47, %p48
      %p50 = scmp.ne.s32.totalorder %s39, %s42
      %p51 = scmp.eq.s32.totalorder %s34, 1
      %p52 = por %p50, %p51
      %p53 = scmp.ne.s32.totalorder %s42, %s43
      %p54 = scmp.eq.s32.totalorder %s34, 0
      %p55 = por %p53, %p54
      %p56 = scmp.ne.s32.totalorder %s42, %s43
      %p57 = scmp.eq.s32.totalorder %s35, 1
      %p58 = por %p56, %p57
      %p60 = scmp.ne.s32.totalorder %s43, %s59
      %p61 = scmp.eq.s32.totalorder %s35, 0
      %p62 = por %p60, %p61
      %s63 = ssub.s32 %s29, %s36
      %p64 = scmp.eq.s32.totalorder %s63, 0
      %s66 = sadd.s32 %s65, 1
      %s67 = scalar_select %p64, %s65, %s66
      %p70 = pneg %p64
      %p71 = scmp.eq.s32.totalorder %s29, 1
      %p72 = por %p70, %p71
      %p73 = scmp.ne.s32.totalorder %s65, %s68
      %p74 = scmp.eq.s32.totalorder %s29, 0
      %p75 = por %p73, %p74
      %p76 = scmp.ne.s32.totalorder %s65, %s68
      %p77 = scmp.eq.s32.totalorder %s34, 1
      %p78 = por %p76, %p77
      %p79 = scmp.ne.s32.totalorder %s68, %s69
      %p80 = scmp.eq.s32.totalorder %s34, 0
      %p81 = por %p79, %p80
      %p82 = scmp.ne.s32.totalorder %s68, %s69
      %p83 = scmp.eq.s32.totalorder %s35, 1
      %p84 = por %p82, %p83
      %p86 = scmp.ne.s32.totalorder %s69, %s85
      %p87 = scmp.eq.s32.totalorder %s35, 0
      %p88 = por %p86, %p87
      %s90 = sadd.s32 %s89, 1
      %p93 = scmp.eq.s32.totalorder %s29, 1
      %p94 = scmp.ne.s32.totalorder %s89, %s91
      %p95 = scmp.eq.s32.totalorder %s29, 0
      %p96 = por %p94, %p95
      %p97 = scmp.ne.s32.totalorder %s89, %s91
      %p98 = scmp.eq.s32.totalorder %s34, 1
      %p99 = por %p97, %p98
      %p100 = scmp.ne.s32.totalorder %s91, %s92
      %p101 = scmp.eq.s32.totalorder %s34, 0
      %p102 = por %p100, %p101
      %p103 = scmp.ne.s32.totalorder %s91, %s92
      %p104 = scmp.eq.s32.totalorder %s35, 1
      %p105 = por %p103, %p104
      %p107 = scmp.ne.s32.totalorder %s92, %s106
      %p108 = scmp.eq.s32.totalorder %s35, 0
      %p109 = por %p107, %p108
      %s111 = sadd.s32 %s110, 1
      %p114 = scmp.eq.s32.totalorder %s29, 1
      %p115 = scmp.ne.s32.totalorder %s110, %s112
      %p116 = scmp.eq.s32.totalorder %s29, 0
      %p117 = por %p115, %p116
      %p118 = scmp.ne.s32.totalorder %s110, %s112
      %p119 = scmp.eq.s32.totalorder %s34, 1
      %p120 = por %p118, %p119
      %p121 = scmp.ne.s32.totalorder %s112, %s113
      %p122 = scmp.eq.s32.totalorder %s34, 0
      %p123 = por %p121, %p122
      %p124 = scmp.ne.s32.totalorder %s112, %s113
      %p125 = scmp.eq.s32.totalorder %s35, 1
      %p126 = por %p124, %p125
      %p128 = scmp.ne.s32.totalorder %s113, %s127
      %p129 = scmp.eq.s32.totalorder %s35, 0
      %p130 = por %p128, %p129
      %s132 = sadd.s32 %s131, 1
      %p135 = scmp.eq.s32.totalorder %s29, 1
      %p136 = scmp.ne.s32.totalorder %s131, %s133
      %p137 = scmp.eq.s32.totalorder %s29, 0
      %p138 = por %p136, %p137
      %p139 = scmp.ne.s32.totalorder %s131, %s133
      %p140 = scmp.eq.s32.totalorder %s34, 1
      %p141 = por %p139, %p140
      %p142 = scmp.ne.s32.totalorder %s133, %s134
      %p143 = scmp.eq.s32.totalorder %s34, 0
      %p144 = por %p142, %p143
      %p145 = scmp.ne.s32.totalorder %s133, %s134
      %p146 = scmp.eq.s32.totalorder %s35, 1
      %p147 = por %p145, %p146
      %p149 = scmp.ne.s32.totalorder %s134, %s148
      %p150 = scmp.eq.s32.totalorder %s35, 0
      %p151 = por %p149, %p150
      %s153 = sadd.s32 %s152, 1
      %p156 = scmp.eq.s32.totalorder %s29, 1
      %p157 = scmp.ne.s32.totalorder %s152, %s154
      %p158 = scmp.eq.s32.totalorder %s29, 0
      %p159 = por %p157, %p158
      %p160 = scmp.ne.s32.totalorder %s152, %s154
      %p161 = scmp.eq.s32.totalorder %s34, 1
      %p162 = por %p160, %p161
      %p163 = scmp.ne.s32.totalorder %s154, %s155
      %p164 = scmp.eq.s32.totalorder %s34, 0
      %p165 = por %p163, %p164
      %p166 = scmp.ne.s32.totalorder %s154, %s155
      %p167 = scmp.eq.s32.totalorder %s35, 1
      %p168 = por %p166, %p167
      %p170 = scmp.ne.s32.totalorder %s155, %s169
      %p171 = scmp.eq.s32.totalorder %s35, 0
      %p172 = por %p170, %p171
      %s173 = ssub.s32 %s29, %s36
      %p174 = scmp.eq.s32.totalorder %s173, 0
      %s176 = sadd.s32 %s175, 1
      %s177 = scalar_select %p174, %s175, %s176
      %p180 = pneg %p174
      %p181 = scmp.eq.s32.totalorder %s29, 1
      %p182 = por %p180, %p181
      %p183 = scmp.ne.s32.totalorder %s175, %s178
      %p184 = scmp.eq.s32.totalorder %s29, 0
      %p185 = por %p183, %p184
      %p186 = scmp.ne.s32.totalorder %s175, %s178
      %p187 = scmp.eq.s32.totalorder %s34, 1
      %p188 = por %p186, %p187
      %p189 = scmp.ne.s32.totalorder %s178, %s179
      %p190 = scmp.eq.s32.totalorder %s34, 0
      %p191 = por %p189, %p190
      %p192 = scmp.ne.s32.totalorder %s178, %s179
      %p193 = scmp.eq.s32.totalorder %s35, 1
      %p194 = por %p192, %p193
      %p196 = scmp.ne.s32.totalorder %s179, %s195
      %p197 = scmp.eq.s32.totalorder %s35, 0
      %p198 = por %p196, %p197
      %s199 = ssub.s32 %s29, %s36
      %p200 = scmp.eq.s32.totalorder %s199, 0
      %s202 = sadd.s32 %s201, 1
      %s203 = scalar_select %p200, %s201, %s202
      %p206 = pneg %p200
      %p207 = scmp.eq.s32.totalorder %s29, 1
      %p208 = por %p206, %p207
      %p209 = scmp.ne.s32.totalorder %s201, %s204
      %p210 = scmp.eq.s32.totalorder %s29, 0
      %p211 = por %p209, %p210
      %p212 = scmp.ne.s32.totalorder %s201, %s204
      %p213 = scmp.eq.s32.totalorder %s34, 1
      %p214 = por %p212, %p213
      %p215 = scmp.ne.s32.totalorder %s204, %s205
      %p216 = scmp.eq.s32.totalorder %s34, 0
      %p217 = por %p215, %p216
      %p218 = scmp.ne.s32.totalorder %s204, %s205
      %p219 = scmp.eq.s32.totalorder %s35, 1
      %p220 = por %p218, %p219
      %p222 = scmp.ne.s32.totalorder %s205, %s221
      %p223 = scmp.eq.s32.totalorder %s35, 0
      %p224 = por %p222, %p223
      %s225 = ssub.s32 %s29, %s36
      %p226 = scmp.eq.s32.totalorder %s225, 0
      %s228 = sadd.s32 %s227, 1
      %s229 = scalar_select %p226, %s227, %s228
      %p232 = pneg %p226
      %p233 = scmp.eq.s32.totalorder %s29, 1
      %p234 = por %p232, %p233
      %p235 = scmp.ne.s32.totalorder %s227, %s230
      %p236 = scmp.eq.s32.totalorder %s29, 0
      %p237 = por %p235, %p236
      %p238 = scmp.ne.s32.totalorder %s227, %s230
      %p239 = scmp.eq.s32.totalorder %s34, 1
      %p240 = por %p238, %p239
      %p241 = scmp.ne.s32.totalorder %s230, %s231
      %p242 = scmp.eq.s32.totalorder %s34, 0
      %p243 = por %p241, %p242
      %p244 = scmp.ne.s32.totalorder %s230, %s231
      %p245 = scmp.eq.s32.totalorder %s35, 1
      %p246 = por %p244, %p245
      %p248 = scmp.ne.s32.totalorder %s231, %s247
      %p249 = scmp.eq.s32.totalorder %s35, 0
      %p250 = por %p248, %p249
      %s251 = ssub.s32 %s29, %s36
      %p252 = scmp.eq.s32.totalorder %s251, 0
      %s254 = sadd.s32 %s253, 1
      %s255 = scalar_select %p252, %s253, %s254
      %p258 = pneg %p252
      %p259 = scmp.eq.s32.totalorder %s29, 1
      %p260 = por %p258, %p259
      %p261 = scmp.ne.s32.totalorder %s253, %s256
      %p262 = scmp.eq.s32.totalorder %s29, 0
      %p263 = por %p261, %p262
      %p264 = scmp.ne.s32.totalorder %s253, %s256
      %p265 = scmp.eq.s32.totalorder %s34, 1
      %p266 = por %p264, %p265
      %p267 = scmp.ne.s32.totalorder %s256, %s257
      %p268 = scmp.eq.s32.totalorder %s34, 0
      %p269 = por %p267, %p268
      %p270 = scmp.ne.s32.totalorder %s256, %s257
      %p271 = scmp.eq.s32.totalorder %s35, 1
      %p272 = por %p270, %p271
      %p274 = scmp.ne.s32.totalorder %s257, %s273
      %p275 = scmp.eq.s32.totalorder %s35, 0
      %p276 = por %p274, %p275
      %p277 = scmp.le.s32.totalorder 1, %s29
      %p278 = scmp.lt.s32.totalorder %s29, 3
      %p279 = pnand %p277, %p278
      %p280 = pneg %p279
      // Predicated region
      $region9: #{tpu_custom_call.1} parent=5 // pred_check
        _
      $region10: #{tpu_custom_call.1} parent=5 // pred_check_branch
        %282 = sbr.rel (%p279) target = $region12
      $region11: #{tpu_custom_call.1} parent=5 // pred_region
        %s283 = ssub.s32 %s29, 1
        // Predicated region
        $region13: #{tpu_custom_call.1} parent=11 // pred_check
          %p284 = pneg %p102
        $region14: #{tpu_custom_call.1} parent=11 // pred_check_branch
          %286 = sbr.rel (%p284) target = $region16
        $region15: #{tpu_custom_call.1} parent=11 // pred_region
          %288 = vsyncadd [#allocation6], 0
          %s289 = sshll.u32 %s2, 4
          %s290 = int_to_ptr.hbm [resolvable:$true] %s289
          %s291 = sshll.u32 [#allocation7], 4
          %s292 = int_to_ptr.vmem [resolvable:$true] %s291
          %297 = dma.hbm_to_vmem [thread:$0]  %s290, 2048, %s292, [#allocation6], 128, 128, 8
        $region16: #{tpu_custom_call.1} parent=11 // pred_fallthru
          _
        // Predicated region
        $region17: #{tpu_custom_call.1} parent=11 // pred_check
          %p298 = pneg %p123
        $region18: #{tpu_custom_call.1} parent=11 // pred_check_branch
          %300 = sbr.rel (%p298) target = $region20
        $region19: #{tpu_custom_call.1} parent=11 // pred_region
          _
        $region20: #{tpu_custom_call.1} parent=11 // pred_fallthru
          _
        // Predicated region
        $region21: #{tpu_custom_call.1} parent=11 // pred_check
          %p301 = pneg %p144
        $region22: #{tpu_custom_call.1} parent=11 // pred_check_branch
          %303 = sbr.rel (%p301) target = $region24
        $region23: #{tpu_custom_call.1} parent=11 // pred_region
          %305 = vsyncadd [#allocation9], 0
          %s306 = sshll.u32 %s4, 4
          %s307 = int_to_ptr.hbm [resolvable:$true] %s306
          %s308 = sshll.u32 [#allocation8], 4
          %s309 = int_to_ptr.vmem [resolvable:$true] %s308
          %314 = dma.hbm_to_vmem [thread:$0]  %s307, 1024, %s309, [#allocation9], 128, 128, 8
        $region24: #{tpu_custom_call.1} parent=11 // pred_fallthru
          _
        // Predicated region
        $region25: #{tpu_custom_call.1} parent=11 // pred_check
          %p315 = pneg %p165
        $region26: #{tpu_custom_call.1} parent=11 // pred_check_branch
          %317 = sbr.rel (%p315) target = $region28
        $region27: #{tpu_custom_call.1} parent=11 // pred_region
          _
        $region28: #{tpu_custom_call.1} parent=11 // pred_fallthru
          _
      $region12: #{tpu_custom_call.1} parent=5 // pred_fallthru
        _
      %p318 = scmp.lt.s32.totalorder %s29, 2
      // Predicated region
      $region29: #{tpu_custom_call.1} parent=5 // pred_check
        %p319 = pneg %p318
      $region30: #{tpu_custom_call.1} parent=5 // pred_check_branch
        %321 = sbr.rel (%p319) target = $region32
      $region31: #{tpu_custom_call.1} parent=5 // pred_region
        // Predicated region
        $region33: #{tpu_custom_call.1} parent=31 // pred_check
          %p322 = pneg %p49
        $region34: #{tpu_custom_call.1} parent=31 // pred_check_branch
          %324 = sbr.rel (%p322) target = $region36
        $region35: #{tpu_custom_call.1} parent=31 // pred_region
          %s325 = sand.u32 %s29, 1
          %s326 = scalar_lea.sflag [#allocation3], %s325
          %s327 = sand.u32 %s39, 1
          %s328 = smul.addr %s327, 8
          %s329 = scalar_lea.vmem [#allocation2], %s328
          %331 = vsyncadd %s326, 0
          %s332 = smul.addr %s29, 8
          %s333 = scalar_lea.hbm %s0, %s332
          %s335 = sshll.u32 %s333, 4
          %s336 = int_to_ptr.hbm [resolvable:$true] %s335
          %s337 = sshll.u32 %s329, 4
          %s338 = int_to_ptr.vmem [resolvable:$true] %s337
          %340 = dma.hbm_to_vmem [thread:$0]  %s336, 128, %s338, %s326
        $region36: #{tpu_custom_call.1} parent=31 // pred_fallthru
          _
        // Predicated region
        $region37: #{tpu_custom_call.1} parent=31 // pred_check
          %p341 = pneg %p75
        $region38: #{tpu_custom_call.1} parent=31 // pred_check_branch
          %343 = sbr.rel (%p341) target = $region40
        $region39: #{tpu_custom_call.1} parent=31 // pred_region
          %s344 = sand.u32 %s29, 1
          %s345 = scalar_lea.sflag [#allocation6], %s344
          %s346 = sand.u32 %s65, 1
          %s347 = smul.addr %s346, 128
          %s348 = scalar_lea.vmem [#allocation5], %s347
          %s349 = smul.u32 8, %s29
          %351 = vsyncadd %s345, 0
          %s352 = smul.addr %s349, 2
          %s353 = smul.addr %s352, 8
          %s354 = scalar_lea.hbm %s1, %s353
          %s355 = sshll.u32 %s354, 4
          %s356 = int_to_ptr.hbm [resolvable:$true] %s355
          %s357 = sshll.u32 %s348, 4
          %s358 = int_to_ptr.vmem [resolvable:$true] %s357
          %363 = dma.hbm_to_vmem [thread:$0]  %s356, 2048, %s358, %s345, 128, 128, 8
        $region40: #{tpu_custom_call.1} parent=31 // pred_fallthru
          _
        // Predicated region
        $region41: #{tpu_custom_call.1} parent=31 // pred_check
          %p364 = pneg %p185
        $region42: #{tpu_custom_call.1} parent=31 // pred_check_branch
          %366 = sbr.rel (%p364) target = $region44
        $region43: #{tpu_custom_call.1} parent=31 // pred_region
          %s367 = sand.u32 %s29, 1
          %s368 = scalar_lea.sflag [#allocation3], %s367
          %s369 = sand.u32 %s175, 1
          %s370 = smul.addr %s369, 8
          %s371 = scalar_lea.vmem [#allocation10], %s370
          %373 = vsyncadd %s368, 0
          %s374 = smul.addr %s29, 8
          %s375 = scalar_lea.hbm %s6, %s374
          %s377 = sshll.u32 %s375, 4
          %s378 = int_to_ptr.hbm [resolvable:$true] %s377
          %s379 = sshll.u32 %s371, 4
          %s380 = int_to_ptr.vmem [resolvable:$true] %s379
          %382 = dma.hbm_to_vmem [thread:$0]  %s378, 128, %s380, %s368
        $region44: #{tpu_custom_call.1} parent=31 // pred_fallthru
          _
      $region32: #{tpu_custom_call.1} parent=5 // pred_fallthru
        _
      %p383 = scmp.le.s32.totalorder 1, %s29
      %p384 = scmp.lt.s32.totalorder %s29, 3
      %p385 = pnand %p383, %p384
      %p386 = pneg %p385
      // Predicated region
      $region45: #{tpu_custom_call.1} parent=5 // pred_check
        _
      $region46: #{tpu_custom_call.1} parent=5 // pred_check_branch
        %388 = sbr.rel (%p385) target = $region48
      $region47: #{tpu_custom_call.1} parent=5 // pred_region
        %s389 = ssub.s32 %s29, 1
        %s390 = sand.u32 %s34, 1
        %s391 = scalar_lea.sflag [#allocation3], %s390
        %s392 = sand.u32 %s42, 1
        %s393 = smul.addr %s392, 8
        %s394 = scalar_lea.vmem [#allocation2], %s393
        // Predicated region
        $region49: #{tpu_custom_call.1} parent=47 // pred_check
          %p395 = pneg %p55
        $region50: #{tpu_custom_call.1} parent=47 // pred_check_branch
          %397 = sbr.rel (%p395) target = $region52
        $region51: #{tpu_custom_call.1} parent=47 // pred_region
          %399 = dma.done %s391, 128
        $region52: #{tpu_custom_call.1} parent=47 // pred_fallthru
          _
        %s400 = sand.u32 %s34, 1
        %s401 = scalar_lea.sflag [#allocation6], %s400
        %s402 = sand.u32 %s68, 1
        %s403 = smul.addr %s402, 128
        %s404 = scalar_lea.vmem [#allocation5], %s403
        // Predicated region
        $region53: #{tpu_custom_call.1} parent=47 // pred_check
          %p405 = pneg %p81
        $region54: #{tpu_custom_call.1} parent=47 // pred_check_branch
          %407 = sbr.rel (%p405) target = $region56
        $region55: #{tpu_custom_call.1} parent=47 // pred_region
          %409 = dma.done %s401, 2048
        $region56: #{tpu_custom_call.1} parent=47 // pred_fallthru
          _
        // Predicated region
        $region57: #{tpu_custom_call.1} parent=47 // pred_check
          %p410 = pneg %p102
        $region58: #{tpu_custom_call.1} parent=47 // pred_check_branch
          %412 = sbr.rel (%p410) target = $region60
        $region59: #{tpu_custom_call.1} parent=47 // pred_region
          %414 = dma.done [#allocation6], 2048
        $region60: #{tpu_custom_call.1} parent=47 // pred_fallthru
          _
        // Predicated region
        $region61: #{tpu_custom_call.1} parent=47 // pred_check
          %p415 = pneg %p144
        $region62: #{tpu_custom_call.1} parent=47 // pred_check_branch
          %417 = sbr.rel (%p415) target = $region64
        $region63: #{tpu_custom_call.1} parent=47 // pred_region
          %419 = dma.done [#allocation9], 1024
        $region64: #{tpu_custom_call.1} parent=47 // pred_fallthru
          _
        %s420 = sand.u32 %s34, 1
        %s421 = scalar_lea.sflag [#allocation3], %s420
        %s422 = sand.u32 %s178, 1
        %s423 = smul.addr %s422, 8
        %s424 = scalar_lea.vmem [#allocation10], %s423
        // Predicated region
        $region65: #{tpu_custom_call.1} parent=47 // pred_check
          %p425 = pneg %p191
        $region66: #{tpu_custom_call.1} parent=47 // pred_check_branch
          %427 = sbr.rel (%p425) target = $region68
        $region67: #{tpu_custom_call.1} parent=47 // pred_region
          %429 = dma.done %s421, 128
        $region68: #{tpu_custom_call.1} parent=47 // pred_fallthru
          _
        %s430 = sand.u32 %s34, 1
        %s431 = scalar_lea.sflag [#allocation3], %s430
        %s432 = sand.u32 %s42, 1
        %s433 = smul.addr %s432, 8
        %s434 = scalar_lea.vmem [#allocation2], %s433
        %p435 = pneg %p55
        %p436 = pneg %p52
        %s437 = sand.u32 %s34, 1
        %s438 = scalar_lea.sflag [#allocation6], %s437
        %s439 = sand.u32 %s68, 1
        %s440 = smul.addr %s439, 128
        %s441 = scalar_lea.vmem [#allocation5], %s440
        %p442 = pneg %p81
        %p443 = pneg %p78
        %p444 = pneg %p102
        %p445 = pneg %p99
        %p446 = pneg %p123
        %p447 = pneg %p120
        %p448 = pneg %p144
        %p449 = pneg %p141
        %p450 = pneg %p165
        %p451 = pneg %p162
        %s452 = sand.u32 %s34, 1
        %s453 = scalar_lea.sflag [#allocation3], %s452
        %s454 = sand.u32 %s178, 1
        %s455 = smul.addr %s454, 8
        %s456 = scalar_lea.vmem [#allocation10], %s455
        %p457 = pneg %p191
        %p458 = pneg %p188
        %p459 = pneg %p217
        %p460 = pneg %p214
        %s461 = sand.u32 %s204, 1
        %s462 = scalar_lea.sflag [#allocation4], %s461
        %s463 = sand.u32 %s204, 1
        %s464 = smul.addr %s463, 8
        %s465 = scalar_lea.vmem [#allocation11], %s464
        %p466 = pneg %p243
        %p467 = pneg %p240
        %s468 = sand.u32 %s34, 1
        %s469 = scalar_lea.sflag [#allocation13], %s468
        %s470 = sand.u32 %s230, 1
        %s471 = smul.addr %s470, 8
        %s472 = scalar_lea.vmem [#allocation12], %s471
        %p473 = pneg %p269
        %p474 = pneg %p266
        %s475 = sand.u32 %s34, 1
        %s476 = scalar_lea.sflag [#allocation13], %s475
        %s477 = sand.u32 %s256, 1
        %s478 = smul.addr %s477, 128
        %s479 = scalar_lea.vmem [#allocation14], %s478
        %s480 = smul.u32 8, %s34
        %s481 = smul.u32 8, %s34
        %v482 = vld [vmem:[%s404] sm:$0xff]
        %v483 = vld [vmem:[%s404 + $0x8] sm:$0xff]
        %v484 = vld [vmem:[%s404 + $0x10] sm:$0xff]
        %v485 = vld [vmem:[%s404 + $0x18] sm:$0xff]
        %v486 = vld [vmem:[%s404 + $0x20] sm:$0xff]
        %v487 = vld [vmem:[%s404 + $0x28] sm:$0xff]
        %v488 = vld [vmem:[%s404 + $0x30] sm:$0xff]
        %v489 = vld [vmem:[%s404 + $0x38] sm:$0xff]
        %v490 = vld [vmem:[%s404 + $0x40] sm:$0xff]
        %v491 = vld [vmem:[%s404 + $0x48] sm:$0xff]
        %v492 = vld [vmem:[%s404 + $0x50] sm:$0xff]
        %v493 = vld [vmem:[%s404 + $0x58] sm:$0xff]
        %v494 = vld [vmem:[%s404 + $0x60] sm:$0xff]
        %v495 = vld [vmem:[%s404 + $0x68] sm:$0xff]
        %v496 = vld [vmem:[%s404 + $0x70] sm:$0xff]
        %v497 = vld [vmem:[%s404 + $0x78] sm:$0xff]
        %v498 = vld [vmem:[#allocation7] sm:$0xff]
        %v499 = vld [vmem:[#allocation7 + $0x8] sm:$0xff]
        %v500 = vld [vmem:[#allocation7 + $0x10] sm:$0xff]
        %v501 = vld [vmem:[#allocation7 + $0x18] sm:$0xff]
        %v502 = vld [vmem:[#allocation7 + $0x20] sm:$0xff]
        %v503 = vld [vmem:[#allocation7 + $0x28] sm:$0xff]
        %v504 = vld [vmem:[#allocation7 + $0x30] sm:$0xff]
        %v505 = vld [vmem:[#allocation7 + $0x38] sm:$0xff]
        %v506 = vld [vmem:[#allocation7 + $0x40] sm:$0xff]
        %v507 = vld [vmem:[#allocation7 + $0x48] sm:$0xff]
        %v508 = vld [vmem:[#allocation7 + $0x50] sm:$0xff]
        %v509 = vld [vmem:[#allocation7 + $0x58] sm:$0xff]
        %v510 = vld [vmem:[#allocation7 + $0x60] sm:$0xff]
        %v511 = vld [vmem:[#allocation7 + $0x68] sm:$0xff]
        %v512 = vld [vmem:[#allocation7 + $0x70] sm:$0xff]
        %v513 = vld [vmem:[#allocation7 + $0x78] sm:$0xff]
        %v514 = vld [vmem:[%s3] sm:$0x1]
        %v516 = vperm.slane %v514, 0
        %518 = vmatpush.msra.mxu0 %v513
        %519 = vmatpush.msra.mxu0 %v512
        %520 = vmatpush.msra.mxu0 %v511
        %521 = vmatpush.msra.mxu0 %v510
        %522 = vmatpush.msra.mxu0 %v509
        %523 = vmatpush.msra.mxu0 %v508
        %524 = vmatpush.msra.mxu0 %v507
        %525 = vmatpush.msra.mxu0 %v506
        %526 = vmatpush.msra.mxu0 %v505
        %527 = vmatpush.msra.mxu0 %v504
        %528 = vmatpush.msra.mxu0 %v503
        %529 = vmatpush.msra.mxu0 %v502
        %530 = vmatpush.msra.mxu0 %v501
        %531 = vmatpush.msra.mxu0 %v500
        %532 = vmatpush.msra.mxu0 %v499
        %533 = vmatpush.msra.mxu0 %v498
        %534 = vmatmul.f32.gmra.mxu0 %v482
        %v535 = vpop.f32.mrf.mxu0
        %v536 = vadd.f32 %v516, %v535
        %537 = vmatmul.f32.gmra.mxu0 %v483
        %v538 = vpop.f32.mrf.mxu0
        %v539 = vadd.f32 %v516, %v538
        %540 = vmatmul.f32.gmra.mxu0 %v484
        %v541 = vpop.f32.mrf.mxu0
        %v542 = vadd.f32 %v516, %v541
        %543 = vmatmul.f32.gmra.mxu0 %v485
        %v544 = vpop.f32.mrf.mxu0
        %v545 = vadd.f32 %v516, %v544
        %546 = vmatmul.f32.gmra.mxu0 %v486
        %v547 = vpop.f32.mrf.mxu0
        %v548 = vadd.f32 %v516, %v547
        %549 = vmatmul.f32.gmra.mxu0 %v487
        %v550 = vpop.f32.mrf.mxu0
        %v551 = vadd.f32 %v516, %v550
        %552 = vmatmul.f32.gmra.mxu0 %v488
        %v553 = vpop.f32.mrf.mxu0
        %v554 = vadd.f32 %v516, %v553
        %555 = vmatmul.f32.gmra.mxu0 %v489
        %v556 = vpop.f32.mrf.mxu0
        %v557 = vadd.f32 %v516, %v556
        %558 = vmatmul.f32.gmra.mxu0 %v490
        %v559 = vpop.f32.mrf.mxu0
        %v560 = vadd.f32 %v516, %v559
        %561 = vmatmul.f32.gmra.mxu0 %v491
        %v562 = vpop.f32.mrf.mxu0
        %v563 = vadd.f32 %v516, %v562
        %564 = vmatmul.f32.gmra.mxu0 %v492
        %v565 = vpop.f32.mrf.mxu0
        %v566 = vadd.f32 %v516, %v565
        %567 = vmatmul.f32.gmra.mxu0 %v493
        %v568 = vpop.f32.mrf.mxu0
        %v569 = vadd.f32 %v516, %v568
        %570 = vmatmul.f32.gmra.mxu0 %v494
        %v571 = vpop.f32.mrf.mxu0
        %v572 = vadd.f32 %v516, %v571
        %573 = vmatmul.f32.gmra.mxu0 %v495
        %v574 = vpop.f32.mrf.mxu0
        %v575 = vadd.f32 %v516, %v574
        %576 = vmatmul.f32.gmra.mxu0 %v496
        %v577 = vpop.f32.mrf.mxu0
        %v578 = vadd.f32 %v516, %v577
        %579 = vmatmul.f32.gmra.mxu0 %v497
        %v580 = vpop.f32.mrf.mxu0
        %v581 = vadd.f32 %v516, %v580
        %582 = vdwg.mxu0
        %v583 = vld [vmem:[%s394] sm:$0xff]
        %v584 = vld [vmem:[#allocation8] sm:$0xff]
        %v585 = vld [vmem:[#allocation8 + $0x8] sm:$0xff]
        %v586 = vld [vmem:[#allocation8 + $0x10] sm:$0xff]
        %v587 = vld [vmem:[#allocation8 + $0x18] sm:$0xff]
        %v588 = vld [vmem:[#allocation8 + $0x20] sm:$0xff]
        %v589 = vld [vmem:[#allocation8 + $0x28] sm:$0xff]
        %v590 = vld [vmem:[#allocation8 + $0x30] sm:$0xff]
        %v591 = vld [vmem:[#allocation8 + $0x38] sm:$0xff]
        %v592 = vld [vmem:[%s5] sm:$0x1]
        %v593 = vld [vmem:[%s424] sm:$0xff]
        %vm594 = vcmask 523264
        %v596 = vsel %vm594, %v583, 0
        %598 = vmatpush.msra.mxu0 0.0
        %599 = vmatpush.msra.mxu0 0.0
        %600 = vmatpush.msra.mxu0 0.0
        %601 = vmatpush.msra.mxu0 0.0
        %602 = vmatpush.msra.mxu0 0.0
        %603 = vmatpush.msra.mxu0 0.0
        %604 = vmatpush.msra.mxu0 0.0
        %605 = vmatpush.msra.mxu0 0.0
        %606 = vmatpush.msra.mxu0 %v591
        %607 = vmatpush.msra.mxu0 %v590
        %608 = vmatpush.msra.mxu0 %v589
        %609 = vmatpush.msra.mxu0 %v588
        %610 = vmatpush.msra.mxu0 %v587
        %611 = vmatpush.msra.mxu0 %v586
        %612 = vmatpush.msra.mxu0 %v585
        %613 = vmatpush.msra.mxu0 %v584
        %614 = vmatmul.f32.gmra.mxu0 %v596
        %v615 = vpop.f32.mrf.mxu0
        %v616 = vadd.f32 0.0, %v615
        %617 = vdwg.mxu0
        %v619 = vrot.slane %v616, 1
        %v620 = vrot.slane %v616, 2
        %v621 = vrot.slane %v616, 3
        %v622 = vrot.slane %v616, 4
        %v623 = vrot.slane %v616, 5
        %v624 = vrot.slane %v616, 6
        %v625 = vrot.slane %v616, 7
        %v626 = vperm.slane %v616, 0
        %v627 = vperm.slane %v619, 0
        %v628 = vperm.slane %v620, 0
        %v629 = vperm.slane %v621, 0
        %v630 = vperm.slane %v622, 0
        %v631 = vperm.slane %v623, 0
        %v632 = vperm.slane %v624, 0
        %v633 = vperm.slane %v625, 0
        %v642 = vadd.f32 %v536, %v626
        %v643 = vadd.f32 %v539, %v626
        %v644 = vadd.f32 %v542, %v627
        %v645 = vadd.f32 %v545, %v627
        %v646 = vadd.f32 %v548, %v628
        %v647 = vadd.f32 %v551, %v628
        %v648 = vadd.f32 %v554, %v629
        %v649 = vadd.f32 %v557, %v629
        %v650 = vadd.f32 %v560, %v630
        %v651 = vadd.f32 %v563, %v630
        %v652 = vadd.f32 %v566, %v631
        %v653 = vadd.f32 %v569, %v631
        %v654 = vadd.f32 %v572, %v632
        %v655 = vadd.f32 %v575, %v632
        %v656 = vadd.f32 %v578, %v633
        %v657 = vadd.f32 %v581, %v633
        %v658 = vtanh.pop %v642
        %v659 = vtanh.pop %v643
        %v660 = vtanh.pop %v644
        %v661 = vtanh.pop %v645
        %v662 = vtanh.pop %v646
        %v663 = vtanh.pop %v647
        %v664 = vtanh.pop %v648
        %v665 = vtanh.pop %v649
        %v666 = vtanh.pop %v650
        %v667 = vtanh.pop %v651
        %v668 = vtanh.pop %v652
        %v669 = vtanh.pop %v653
        %v670 = vtanh.pop %v654
        %v671 = vtanh.pop %v655
        %v672 = vtanh.pop %v656
        %v673 = vtanh.pop %v657
        %v675 = vperm.slane %v592, 0
        %v677 = vmul.f32 %v658, %v675
        %v678 = vmul.f32 %v659, %v675
        %v679 = vmul.f32 %v660, %v675
        %v680 = vmul.f32 %v661, %v675
        %v681 = vmul.f32 %v662, %v675
        %v682 = vmul.f32 %v663, %v675
        %v683 = vmul.f32 %v664, %v675
        %v684 = vmul.f32 %v665, %v675
        %v685 = vmul.f32 %v666, %v675
        %v686 = vmul.f32 %v667, %v675
        %v687 = vmul.f32 %v668, %v675
        %v688 = vmul.f32 %v669, %v675
        %v689 = vmul.f32 %v670, %v675
        %v690 = vmul.f32 %v671, %v675
        %v691 = vmul.f32 %v672, %v675
        %v692 = vmul.f32 %v673, %v675
        %693 = vadd.xlane.f32.xlu0 %v677
        %v694 = vpop.xlane.xlu0 %693
        %695 = vadd.xlane.f32.xlu0 %v678
        %v696 = vpop.xlane.xlu0 %695
        %697 = vadd.xlane.f32.xlu0 %v679
        %v698 = vpop.xlane.xlu0 %697
        %699 = vadd.xlane.f32.xlu0 %v680
        %v700 = vpop.xlane.xlu0 %699
        %701 = vadd.xlane.f32.xlu0 %v681
        %v702 = vpop.xlane.xlu0 %701
        %703 = vadd.xlane.f32.xlu0 %v682
        %v704 = vpop.xlane.xlu0 %703
        %705 = vadd.xlane.f32.xlu0 %v683
        %v706 = vpop.xlane.xlu0 %705
        %707 = vadd.xlane.f32.xlu0 %v684
        %v708 = vpop.xlane.xlu0 %707
        %709 = vadd.xlane.f32.xlu0 %v685
        %v710 = vpop.xlane.xlu0 %709
        %711 = vadd.xlane.f32.xlu0 %v686
        %v712 = vpop.xlane.xlu0 %711
        %713 = vadd.xlane.f32.xlu0 %v687
        %v714 = vpop.xlane.xlu0 %713
        %715 = vadd.xlane.f32.xlu0 %v688
        %v716 = vpop.xlane.xlu0 %715
        %717 = vadd.xlane.f32.xlu0 %v689
        %v718 = vpop.xlane.xlu0 %717
        %719 = vadd.xlane.f32.xlu0 %v690
        %v720 = vpop.xlane.xlu0 %719
        %721 = vadd.xlane.f32.xlu0 %v691
        %v722 = vpop.xlane.xlu0 %721
        %723 = vadd.xlane.f32.xlu0 %v692
        %v724 = vpop.xlane.xlu0 %723
        %vm725 = vcmp.ne.f32.partialorder %v593, 0.0
        %v742 = vlaneseq
        %v743 = vand.u32 %v742, 127
        %v744 = vperm.slane %v694, %v743
        %v745 = vadd.s32 %v743, 4294967288
        %v746 = vperm.slane %v696, %v745
        %vm747 = vcmask 130112
        %v748 = vsel %vm747, %v746, %v744
        %v749 = vperm.slane %v698, %v743
        %v750 = vperm.slane %v700, %v745
        %v751 = vsel %vm747, %v750, %v749
        %v752 = vperm.slane %v702, %v743
        %v753 = vperm.slane %v704, %v745
        %v754 = vsel %vm747, %v753, %v752
        %v755 = vperm.slane %v706, %v743
        %v756 = vperm.slane %v708, %v745
        %v757 = vsel %vm747, %v756, %v755
        %v758 = vperm.slane %v710, %v743
        %v759 = vperm.slane %v712, %v745
        %v760 = vsel %vm747, %v759, %v758
        %v761 = vperm.slane %v714, %v743
        %v762 = vperm.slane %v716, %v745
        %v763 = vsel %vm747, %v762, %v761
        %v764 = vperm.slane %v718, %v743
        %v765 = vperm.slane %v720, %v745
        %v766 = vsel %vm747, %v765, %v764
        %v767 = vperm.slane %v722, %v743
        %v768 = vperm.slane %v724, %v745
        %v769 = vsel %vm747, %v768, %v767
        %vm770 = vcmask 1041409
        %v771 = vsel %vm770, %v751, %v748
        %vm772 = vcmask 1042434
        %v773 = vsel %vm772, %v754, %v771
        %vm774 = vcmask 1043459
        %v775 = vsel %vm774, %v757, %v773
        %vm776 = vcmask 1044484
        %v777 = vsel %vm776, %v760, %v775
        %vm778 = vcmask 1045509
        %v779 = vsel %vm778, %v763, %v777
        %vm780 = vcmask 1046534
        %v781 = vsel %vm780, %v766, %v779
        %vm782 = vcmask 1047559
        %v783 = vsel %vm782, %v769, %v781
        %v785 = vsel %vm725, -1000000.0, %v783
        %vm786 = vcmask 130048
        %v787 = vsel %vm786, %v785, -inf
        %788 = vmax.xlane.f32.xlu0 %v787
        %v789 = vpop.xlane.xlu0 %788
        %v790 = vsub.f32 %v785, %v789
        %v791 = vmul.f32 %v790, 1.442695
        %v792 = vpow.pop %v791
        %v793 = vsel %vm786, %v792, 0.0
        %794 = vadd.xlane.f32.xlu0 %v793
        %v795 = vpop.xlane.xlu0 %794
        %v796 = vrcp.pop %v795
        %v797 = vmul.f32 %v795, %v796
        %v798 = vsub.f32 1.0, %v797
        %v799 = vmul.f32 %v796, %v798
        %v800 = vadd.f32 %v796, %v799
        %vm801 = vweird.f32 %v795
        %vm802 = vweird.f32 %v796
        %vm803 = vmor %vm801, %vm802
        %v804 = vsel %vm803, %v796, %v800
        %v805 = vand.u32 2147483647, %v795
        %vm806 = vcmp.eq.f32.partialorder %v805, 8.507059e+37
        %v807 = vand.u32 %v795, 2147483648
        %v808 = vor.u32 1.1754944e-38, %v807
        %v809 = vsel %vm806, %v808, %v804
        %v810 = vmul.f32 %v792, %v809
        %v811 = vperm.slane %v810, 0
        %v812 = vlaneseq
        %v813 = vshrl.u32 %v812, 7
        %815 = vset.pattern.permute.xlu0 %v813
        %816 = vperm.xlu0 %815, %v811
        %v817 = vpop.permute.xlu0 %816
        %v818 = vlaneseq
        %v819 = vshrl.u32 %v818, 7
        %v820 = vadd.s32 %v819, 8
        %821 = vset.pattern.permute.xlu0 %v820
        %822 = vperm.xlu0 %821, %v811
        %v823 = vpop.permute.xlu0 %822
        %v824 = vperm.slane %v810, 1
        %v825 = vlaneseq
        %v826 = vshrl.u32 %v825, 7
        %828 = vset.pattern.permute.xlu0 %v826
        %829 = vperm.xlu0 %828, %v824
        %v830 = vpop.permute.xlu0 %829
        %v831 = vlaneseq
        %v832 = vshrl.u32 %v831, 7
        %v833 = vadd.s32 %v832, 8
        %834 = vset.pattern.permute.xlu0 %v833
        %835 = vperm.xlu0 %834, %v824
        %v836 = vpop.permute.xlu0 %835
        %v837 = vperm.slane %v810, 2
        %v838 = vlaneseq
        %v839 = vshrl.u32 %v838, 7
        %841 = vset.pattern.permute.xlu0 %v839
        %842 = vperm.xlu0 %841, %v837
        %v843 = vpop.permute.xlu0 %842
        %v844 = vlaneseq
        %v845 = vshrl.u32 %v844, 7
        %v846 = vadd.s32 %v845, 8
        %847 = vset.pattern.permute.xlu0 %v846
        %848 = vperm.xlu0 %847, %v837
        %v849 = vpop.permute.xlu0 %848
        %v850 = vperm.slane %v810, 3
        %v851 = vlaneseq
        %v852 = vshrl.u32 %v851, 7
        %854 = vset.pattern.permute.xlu0 %v852
        %855 = vperm.xlu0 %854, %v850
        %v856 = vpop.permute.xlu0 %855
        %v857 = vlaneseq
        %v858 = vshrl.u32 %v857, 7
        %v859 = vadd.s32 %v858, 8
        %860 = vset.pattern.permute.xlu0 %v859
        %861 = vperm.xlu0 %860, %v850
        %v862 = vpop.permute.xlu0 %861
        %v863 = vperm.slane %v810, 4
        %v864 = vlaneseq
        %v865 = vshrl.u32 %v864, 7
        %867 = vset.pattern.permute.xlu0 %v865
        %868 = vperm.xlu0 %867, %v863
        %v869 = vpop.permute.xlu0 %868
        %v870 = vlaneseq
        %v871 = vshrl.u32 %v870, 7
        %v872 = vadd.s32 %v871, 8
        %873 = vset.pattern.permute.xlu0 %v872
        %874 = vperm.xlu0 %873, %v863
        %v875 = vpop.permute.xlu0 %874
        %v876 = vperm.slane %v810, 5
        %v877 = vlaneseq
        %v878 = vshrl.u32 %v877, 7
        %880 = vset.pattern.permute.xlu0 %v878
        %881 = vperm.xlu0 %880, %v876
        %v882 = vpop.permute.xlu0 %881
        %v883 = vlaneseq
        %v884 = vshrl.u32 %v883, 7
        %v885 = vadd.s32 %v884, 8
        %886 = vset.pattern.permute.xlu0 %v885
        %887 = vperm.xlu0 %886, %v876
        %v888 = vpop.permute.xlu0 %887
        %v889 = vperm.slane %v810, 6
        %v890 = vlaneseq
        %v891 = vshrl.u32 %v890, 7
        %893 = vset.pattern.permute.xlu0 %v891
        %894 = vperm.xlu0 %893, %v889
        %v895 = vpop.permute.xlu0 %894
        %v896 = vlaneseq
        %v897 = vshrl.u32 %v896, 7
        %v898 = vadd.s32 %v897, 8
        %899 = vset.pattern.permute.xlu0 %v898
        %900 = vperm.xlu0 %899, %v889
        %v901 = vpop.permute.xlu0 %900
        %v902 = vperm.slane %v810, 7
        %v903 = vlaneseq
        %v904 = vshrl.u32 %v903, 7
        %906 = vset.pattern.permute.xlu0 %v904
        %907 = vperm.xlu0 %906, %v902
        %v908 = vpop.permute.xlu0 %907
        %v909 = vlaneseq
        %v910 = vshrl.u32 %v909, 7
        %v911 = vadd.s32 %v910, 8
        %912 = vset.pattern.permute.xlu0 %v911
        %913 = vperm.xlu0 %912, %v902
        %v914 = vpop.permute.xlu0 %913
        %v915 = vmul.f32 %v817, %v482
        %v916 = vmul.f32 %v823, %v483
        %v917 = vmul.f32 %v830, %v484
        %v918 = vmul.f32 %v836, %v485
        %v919 = vmul.f32 %v843, %v486
        %v920 = vmul.f32 %v849, %v487
        %v921 = vmul.f32 %v856, %v488
        %v922 = vmul.f32 %v862, %v489
        %v923 = vmul.f32 %v869, %v490
        %v924 = vmul.f32 %v875, %v491
        %v925 = vmul.f32 %v882, %v492
        %v926 = vmul.f32 %v888, %v493
        %v927 = vmul.f32 %v895, %v494
        %v928 = vmul.f32 %v901, %v495
        %v929 = vmul.f32 %v908, %v496
        %v930 = vmul.f32 %v914, %v497
        %v931 = vadd.f32 %v915, %v916
        %v932 = vrot.slane %v931, 4
        %v933 = vadd.f32 %v931, %v932
        %v934 = vrot.slane %v933, 2
        %v935 = vadd.f32 %v933, %v934
        %v936 = vrot.slane %v935, 1
        %v937 = vadd.f32 %v935, %v936
        %v938 = vadd.f32 %v917, %v918
        %v939 = vrot.slane %v938, 4
        %v940 = vadd.f32 %v938, %v939
        %v941 = vrot.slane %v940, 2
        %v942 = vadd.f32 %v940, %v941
        %v943 = vrot.slane %v942, 1
        %v944 = vadd.f32 %v942, %v943
        %v945 = vadd.f32 %v919, %v920
        %v946 = vrot.slane %v945, 4
        %v947 = vadd.f32 %v945, %v946
        %v948 = vrot.slane %v947, 2
        %v949 = vadd.f32 %v947, %v948
        %v950 = vrot.slane %v949, 1
        %v951 = vadd.f32 %v949, %v950
        %v952 = vadd.f32 %v921, %v922
        %v953 = vrot.slane %v952, 4
        %v954 = vadd.f32 %v952, %v953
        %v955 = vrot.slane %v954, 2
        %v956 = vadd.f32 %v954, %v955
        %v957 = vrot.slane %v956, 1
        %v958 = vadd.f32 %v956, %v957
        %v959 = vadd.f32 %v923, %v924
        %v960 = vrot.slane %v959, 4
        %v961 = vadd.f32 %v959, %v960
        %v962 = vrot.slane %v961, 2
        %v963 = vadd.f32 %v961, %v962
        %v964 = vrot.slane %v963, 1
        %v965 = vadd.f32 %v963, %v964
        %v966 = vadd.f32 %v925, %v926
        %v967 = vrot.slane %v966, 4
        %v968 = vadd.f32 %v966, %v967
        %v969 = vrot.slane %v968, 2
        %v970 = vadd.f32 %v968, %v969
        %v971 = vrot.slane %v970, 1
        %v972 = vadd.f32 %v970, %v971
        %v973 = vadd.f32 %v927, %v928
        %v974 = vrot.slane %v973, 4
        %v975 = vadd.f32 %v973, %v974
        %v976 = vrot.slane %v975, 2
        %v977 = vadd.f32 %v975, %v976
        %v978 = vrot.slane %v977, 1
        %v979 = vadd.f32 %v977, %v978
        %v980 = vadd.f32 %v929, %v930
        %v981 = vrot.slane %v980, 4
        %v982 = vadd.f32 %v980, %v981
        %v983 = vrot.slane %v982, 2
        %v984 = vadd.f32 %v982, %v983
        %v985 = vrot.slane %v984, 1
        %v986 = vadd.f32 %v984, %v985
        %987 = vst [vmem:[%s479] sm:$0xff] %v536
        %988 = vst [vmem:[%s479 + $0x8] sm:$0xff] %v539
        %989 = vst [vmem:[%s479 + $0x10] sm:$0xff] %v542
        %990 = vst [vmem:[%s479 + $0x18] sm:$0xff] %v545
        %991 = vst [vmem:[%s479 + $0x20] sm:$0xff] %v548
        %992 = vst [vmem:[%s479 + $0x28] sm:$0xff] %v551
        %993 = vst [vmem:[%s479 + $0x30] sm:$0xff] %v554
        %994 = vst [vmem:[%s479 + $0x38] sm:$0xff] %v557
        %995 = vst [vmem:[%s479 + $0x40] sm:$0xff] %v560
        %996 = vst [vmem:[%s479 + $0x48] sm:$0xff] %v563
        %997 = vst [vmem:[%s479 + $0x50] sm:$0xff] %v566
        %998 = vst [vmem:[%s479 + $0x58] sm:$0xff] %v569
        %999 = vst [vmem:[%s479 + $0x60] sm:$0xff] %v572
        %1000 = vst [vmem:[%s479 + $0x68] sm:$0xff] %v575
        %1001 = vst [vmem:[%s479 + $0x70] sm:$0xff] %v578
        %1002 = vst [vmem:[%s479 + $0x78] sm:$0xff] %v581
        %v1011 = vsel %vm770, %v944, %v937
        %v1012 = vsel %vm772, %v951, %v1011
        %v1013 = vsel %vm774, %v958, %v1012
        %v1014 = vsel %vm776, %v965, %v1013
        %v1015 = vsel %vm778, %v972, %v1014
        %v1016 = vsel %vm780, %v979, %v1015
        %v1017 = vsel %vm782, %v986, %v1016
        %1019 = vst [vmem:[%s465] sm:$0xff] %v1017
        %1020 = vst.msk [vmem:[%s472] sm:$0xff] %vm786, %v810
        %s1021 = sand.u32 %s204, 1
        %s1022 = scalar_lea.sflag [#allocation4], %s1021
        %s1023 = sand.u32 %s204, 1
        %s1024 = smul.addr %s1023, 8
        %s1025 = scalar_lea.vmem [#allocation11], %s1024
        %s1026 = sand.u32 %s34, 1
        %s1027 = scalar_lea.sflag [#allocation13], %s1026
        %s1028 = sand.u32 %s230, 1
        %s1029 = smul.addr %s1028, 8
        %s1030 = scalar_lea.vmem [#allocation12], %s1029
        %s1031 = sand.u32 %s34, 1
        %s1032 = scalar_lea.sflag [#allocation13], %s1031
        %s1033 = sand.u32 %s256, 1
        %s1034 = smul.addr %s1033, 128
        %s1035 = scalar_lea.vmem [#allocation14], %s1034
        // Predicated region
        $region69: #{tpu_custom_call.1} parent=47 // pred_check
          %p1036 = pneg %p214
        $region70: #{tpu_custom_call.1} parent=47 // pred_check_branch
          %1038 = sbr.rel (%p1036) target = $region72
        $region71: #{tpu_custom_call.1} parent=47 // pred_region
          %1040 = vsyncadd %s1022, 0
          %s1041 = smul.addr %s34, 8
          %s1042 = scalar_lea.hbm %s7, %s1041
          %s1044 = sshll.u32 %s1025, 4
          %s1045 = int_to_ptr.vmem [resolvable:$true] %s1044
          %s1046 = sshll.u32 %s1042, 4
          %s1047 = int_to_ptr.hbm [resolvable:$true] %s1046
          %1049 = dma.vmem_to_hbm [thread:$0]  %s1045, 128, %s1047, %s1022
        $region72: #{tpu_custom_call.1} parent=47 // pred_fallthru
          _
        // Predicated region
        $region73: #{tpu_custom_call.1} parent=47 // pred_check
          %p1050 = pneg %p240
        $region74: #{tpu_custom_call.1} parent=47 // pred_check_branch
          %1052 = sbr.rel (%p1050) target = $region76
        $region75: #{tpu_custom_call.1} parent=47 // pred_region
          %1054 = vsyncadd %s1027, 0
          %s1055 = smul.addr %s34, 8
          %s1056 = scalar_lea.hbm %s8, %s1055
          %s1058 = sshll.u32 %s1030, 4
          %s1059 = int_to_ptr.vmem [resolvable:$true] %s1058
          %s1060 = sshll.u32 %s1056, 4
          %s1061 = int_to_ptr.hbm [resolvable:$true] %s1060
          %1063 = dma.vmem_to_hbm [thread:$0]  %s1059, 128, %s1061, %s1027
        $region76: #{tpu_custom_call.1} parent=47 // pred_fallthru
          _
        // Predicated region
        $region77: #{tpu_custom_call.1} parent=47 // pred_check
          %p1064 = pneg %p266
        $region78: #{tpu_custom_call.1} parent=47 // pred_check_branch
          %1066 = sbr.rel (%p1064) target = $region80
        $region79: #{tpu_custom_call.1} parent=47 // pred_region
          %s1067 = smul.u32 8, %s34
          %1069 = vsyncadd %s1032, 0
          %s1070 = smul.addr %s1067, 2
          %s1071 = smul.addr %s1070, 8
          %s1072 = scalar_lea.hbm %s9, %s1071
          %s1073 = sshll.u32 %s1035, 4
          %s1074 = int_to_ptr.vmem [resolvable:$true] %s1073
          %s1075 = sshll.u32 %s1072, 4
          %s1076 = int_to_ptr.hbm [resolvable:$true] %s1075
          %1081 = dma.vmem_to_hbm [thread:$0]  %s1074, 2048, %s1076, %s1032, 128, 128, 8
        $region80: #{tpu_custom_call.1} parent=47 // pred_fallthru
          _
      $region48: #{tpu_custom_call.1} parent=5 // pred_fallthru
        _
      %p1082 = scmp.le.s32.totalorder 2, %s29
      // Predicated region
      $region81: #{tpu_custom_call.1} parent=5 // pred_check
        %p1083 = pneg %p1082
      $region82: #{tpu_custom_call.1} parent=5 // pred_check_branch
        %1085 = sbr.rel (%p1083) target = $region84
      $region83: #{tpu_custom_call.1} parent=5 // pred_region
        %s1086 = ssub.s32 %s29, 2
        // Predicated region
        $region85: #{tpu_custom_call.1} parent=83 // pred_check
          %p1087 = pneg %p220
        $region86: #{tpu_custom_call.1} parent=83 // pred_check_branch
          %1089 = sbr.rel (%p1087) target = $region88
        $region87: #{tpu_custom_call.1} parent=83 // pred_region
          %s1090 = sand.u32 %s205, 1
          %s1091 = scalar_lea.sflag [#allocation4], %s1090
          %s1092 = sand.u32 %s205, 1
          %s1093 = smul.addr %s1092, 8
          %s1094 = scalar_lea.vmem [#allocation11], %s1093
          %1096 = dma.done %s1091, 128
        $region88: #{tpu_custom_call.1} parent=83 // pred_fallthru
          _
        // Predicated region
        $region89: #{tpu_custom_call.1} parent=83 // pred_check
          %p1097 = pneg %p246
        $region90: #{tpu_custom_call.1} parent=83 // pred_check_branch
          %1099 = sbr.rel (%p1097) target = $region92
        $region91: #{tpu_custom_call.1} parent=83 // pred_region
          %s1100 = sand.u32 %s35, 1
          %s1101 = scalar_lea.sflag [#allocation13], %s1100
          %s1102 = sand.u32 %s231, 1
          %s1103 = smul.addr %s1102, 8
          %s1104 = scalar_lea.vmem [#allocation12], %s1103
          %1106 = dma.done %s1101, 128
        $region92: #{tpu_custom_call.1} parent=83 // pred_fallthru
          _
        // Predicated region
        $region93: #{tpu_custom_call.1} parent=83 // pred_check
          %p1107 = pneg %p272
        $region94: #{tpu_custom_call.1} parent=83 // pred_check_branch
          %1109 = sbr.rel (%p1107) target = $region96
        $region95: #{tpu_custom_call.1} parent=83 // pred_region
          %s1110 = sand.u32 %s35, 1
          %s1111 = scalar_lea.sflag [#allocation13], %s1110
          %s1112 = sand.u32 %s257, 1
          %s1113 = smul.addr %s1112, 128
          %s1114 = scalar_lea.vmem [#allocation14], %s1113
          %1116 = dma.done %s1111, 2048
        $region96: #{tpu_custom_call.1} parent=83 // pred_fallthru
          _
      $region84: #{tpu_custom_call.1} parent=5 // pred_fallthru
        _
    $region6: #{tpu_custom_call.1} parent=1 // loop_footer
      %s33 = sadd.s32 1, %s29
    $region7: #{tpu_custom_call.1} parent=1 // loop_footer_branch
      %28 = sbr.rel target = $region3
    $region8: #{tpu_custom_call.1} parent=1 // loop_exit
      _
    %1117 = vsyncpa [#allocation3], 1
    %s1118 = scalar_lea.sflag [#allocation3], 1
    %1119 = vsyncpa %s1118, 1
    %1120 = vsyncpa [#allocation6], 1
    %s1121 = scalar_lea.sflag [#allocation6], 1
    %1122 = vsyncpa %s1121, 1
    %1123 = vsyncpa [#allocation9], 1
    %1124 = vsyncpa [#allocation4], 1
    %s1125 = scalar_lea.sflag [#allocation4], 1
    %1126 = vsyncpa %s1125, 1
    %1127 = vsyncpa [#allocation13], 1
    %s1128 = scalar_lea.sflag [#allocation13], 1
    %1129 = vsyncpa %s1128, 1

</llo_original>
